<compile_context>
chip_gen: v7x
topology: tpu7x:2x2x1
jax: 0.10.0
libtpu: 0.0.40
codegen_flags: <defaults>
</compile_context>

<pallas_src>
import jax
import jax.numpy as jnp
from jax.experimental import pallas as pl
from jax.experimental.pallas import tpu as pltpu

NUM_NOTES = 7
NUM_ACTIONS = 2
IN_DIM = NUM_NOTES + 1                 # 8: spectrogram notes + constant bias term

MAX_TB = 8192                          # batch rows per grid step (multiple of 8)
MIN_PALLAS_BATCH = 1024                # below this, plain jnp.dot is cheaper
VMEM_LIMIT_BYTES = 40 * 1024 * 1024    # covers tb=8192 double-buffered on all gens


def _round_up(n, m):
    return ((n + m - 1) // m) * m


def _linear_kernel(x_ref, w_ref, o_ref):
    """o = x @ w on the MXU. x: (tb, 8), w: (8, 2), o: (tb, 2)."""
    o_ref[...] = jnp.dot(
        x_ref[...], w_ref[...], preferred_element_type=jnp.float32
    ).astype(o_ref.dtype)


def shallow_network_forward(x, weight, *, block_rows=None,
                            min_pallas_batch=MIN_PALLAS_BATCH):
    """Forward pass: x [batch, IN_DIM] (or [IN_DIM]), weight [NUM_ACTIONS, IN_DIM].

    Returns [batch, NUM_ACTIONS] (or [NUM_ACTIONS] for 1-D input), matching
    torch's bias-free nn.Linear for this module.
    """
    squeeze = x.ndim == 1
    if squeeze:
        x = x[None, :]

    batch, in_dim = x.shape
    assert in_dim == IN_DIM
    assert weight.shape == (NUM_ACTIONS, IN_DIM)

    x = x.astype(jnp.float32)
    w_t = weight.T.astype(jnp.float32)          # (IN_DIM, NUM_ACTIONS) = (8, 2)

    if batch < min_pallas_batch:
        # Tiny batches: skip the custom-call boundary; XLA fuses this trivially.
        out = x @ w_t
    else:
        tb = MAX_TB if block_rows is None else block_rows
        tb = _round_up(max(8, min(tb, _round_up(batch, 8))), 8)
        grid = (pl.cdiv(batch, tb),)            # ragged last block is masked

        out = pl.pallas_call(
            _linear_kernel,
            out_shape=jax.ShapeDtypeStruct((batch, NUM_ACTIONS), jnp.float32),
            grid=grid,
            in_specs=[
                # x: tiled over batch; last dim (8) equals the full array dim.
                pl.BlockSpec((tb, IN_DIM), lambda i: (i, 0)),
                # weight: tiny (8x2), VMEM-resident across the whole grid.
                pl.BlockSpec((IN_DIM, NUM_ACTIONS), lambda i: (0, 0)),
            ],
            # Narrow (true) output: last dim 2 equals the full array dim, so
            # the (8,128) rule is satisfied; no padded writeback + re-slice.
            out_specs=pl.BlockSpec((tb, NUM_ACTIONS), lambda i: (i, 0)),
            compiler_params=pltpu.CompilerParams(
                dimension_semantics=("parallel",),   # shard batch across TCs
                vmem_limit_bytes=VMEM_LIMIT_BYTES,
            ),
        )(x, w_t)

    if squeeze:
        out = out[0]
    return out


def init_params(key):
    """Weight init matching nn.init.uniform_(a=0.0, b=0.01)."""
    return jax.random.uniform(
        key, (NUM_ACTIONS, IN_DIM), dtype=jnp.float32, minval=0.0, maxval=0.01
    )


def _make_input(key, batch):
    notes = jax.random.normal(key, (batch, NUM_NOTES), dtype=jnp.float32)
    return jnp.concatenate([notes, jnp.ones((batch, 1), jnp.float32)], axis=1)


if __name__ == "__main__":
    key = jax.random.PRNGKey(0)
    k_w, k_x1, k_x2 = jax.random.split(key, 3)

    weight = init_params(k_w)

    # --- Case 1: Pallas path with a ragged multi-step grid (batch % tb != 0).
    batch = 2051
    x = _make_input(k_x1, batch)
    y = jax.block_until_ready(
        shallow_network_forward(x, weight, block_rows=512))
    y_ref = x @ weight.T
    assert y.shape == (batch, NUM_ACTIONS)
    assert jnp.allclose(y, y_ref, atol=1e-6, rtol=1e-6)

    # --- Case 2: demo-sized batch (=2) forced through the Pallas kernel
    #     (single ragged block; OOB tail rows are masked on writeback).
    x2 = _make_input(k_x2, 2)
    y2_ref = x2 @ weight.T
    y2 = jax.block_until_ready(
        shallow_network_forward(x2, weight, min_pallas_batch=0))
    assert y2.shape == (2, NUM_ACTIONS)
    assert jnp.allclose(y2, y2_ref, atol=1e-6, rtol=1e-6)

    # --- Case 3: tiny-batch / 1-D inputs take the fused jnp bypass.
    y3 = jax.block_until_ready(shallow_network_forward(x2, weight))
    assert jnp.allclose(y3, y2_ref, atol=1e-6, rtol=1e-6)
    y4 = jax.block_until_ready(shallow_network_forward(x2[0], weight))
    assert y4.shape == (NUM_ACTIONS,)
    assert jnp.allclose(y4, y2_ref[0], atol=1e-6, rtol=1e-6)

    print("KERNEL_OK")
</pallas_src>

<mosaic_0001>
module attributes {stable_mosaic.version = 11 : i64} {
  func.func @_linear_kernel(%arg0: i32, %arg1: memref<512x8xf32, #tpu.memory_space<vmem>>, %arg2: memref<8x2xf32, #tpu.memory_space<vmem>>, %arg3: memref<512x2xf32, #tpu.memory_space<vmem>>) attributes {dimension_semantics = [#tpu.dimension_semantics<parallel>], iteration_bounds = array<i64: 5>, scalar_prefetch = 0 : i64, scratch_operands = 0 : i64, tpu.core_type = #tpu.core_type<tc>, window_params = [{transform_indices = @transform_0, window_bounds = array<i64: 512, 8>}, {pipeline_mode = #tpu.pipeline_mode<synchronous>, transform_indices = @transform_1, window_bounds = array<i64: 8, 2>}, {transform_indices = @transform_2, window_bounds = array<i64: 512, 2>}]} {
    %c0 = arith.constant 0 : index
    %c0_0 = arith.constant 0 : index
    %0 = vector.load %arg1[%c0, %c0_0] : memref<512x8xf32, #tpu.memory_space<vmem>>, vector<512x8xf32>
    %c0_1 = arith.constant 0 : index
    %c0_2 = arith.constant 0 : index
    %1 = vector.load %arg2[%c0_1, %c0_2] : memref<8x2xf32, #tpu.memory_space<vmem>>, vector<8x2xf32>
    %cst = arith.constant dense<0.000000e+00> : vector<512x2xf32>
    %2 = tpu.matmul %0, %1, %cst {dimension_numbers = #tpu.dot_dimension_numbers<[1], [0], [0], [1], [0, 0, 1, 1], [], []>} : vector<512x8xf32>, vector<8x2xf32>, vector<512x2xf32> -> vector<512x2xf32>
    %c0_3 = arith.constant 0 : index
    %c0_4 = arith.constant 0 : index
    %3 = vector.load %arg3[%c0_3, %c0_4] : memref<512x2xf32, #tpu.memory_space<vmem>>, vector<512x2xf32>
    tpu.vector_store %arg3[%c0_3, %c0_4], %2 {strides = array<i32>} : memref<512x2xf32, #tpu.memory_space<vmem>>, vector<512x2xf32>,
    return
  }
  func.func @transform_0(%arg0: i32) -> (i32, i32) {
    %c0_i32 = arith.constant 0 : i32
    %c0_i32_0 = arith.constant 0 : i32
    return %arg0, %c0_i32 : i32, i32
  }
  func.func @transform_1(%arg0: i32) -> (i32, i32) {
    %c0_i32 = arith.constant 0 : i32
    %c0_i32_0 = arith.constant 0 : i32
    %c0_i32_1 = arith.constant 0 : i32
    return %c0_i32, %c0_i32_0 : i32, i32
  }
  func.func @transform_2(%arg0: i32) -> (i32, i32) {
    %c0_i32 = arith.constant 0 : i32
    %c0_i32_0 = arith.constant 0 : i32
    return %arg0, %c0_i32 : i32, i32
  }
}

</mosaic_0001>

<llo_original>
// kernel: tpu_custom_call.1
$region0: #{tpu_custom_call.1}
  #allocation0 [shape = 'u32[]', space=smem, size = 0x4, offset = 0x4, fixed_abs, tag = 'smem constant byte address 0x4 - core index']
  #allocation1 [shape = 'u32[144,128]{1,0:T(1,128)}', space=vmem, size = 0x12000, scoped, tag = 'internal scratch']
  %s0 = inlined_call_operand.vmem [shape: f32[2051,8], index: 0, kind: input, shape index: {}]
  %s1 = inlined_call_operand.vmem [shape: f32[8,2], index: 1, kind: input, shape index: {}]
  %s2 = inlined_call_operand.vmem [shape: f32[2051,2], index: 2, kind: output, shape index: {}]
  %s3 = sld [smem:[#allocation0]]
  $region89: #{tpu_custom_call.1} parent=0
    _
  %s5 = ssub.s32 1, %s3
  %s6 = scalar_select 0, %s5, %s3
  $region1: #{tpu_custom_call.1} parent=0
    #allocation2 [shape = 'u8[524288]{0}', space=vmem, size = 0x80000, scoped, tag = 'output window, operand 0']
    loop: start=0, step=1, limit=7
    $region2: #{tpu_custom_call.1} parent=1 // loop_pre_header
      _
    $region3: #{tpu_custom_call.1} parent=1 // loop_header
      %s8 = sphi 0, %s12
      %p9 = scmp.ge.s32.totalorder %s8, 7
      %s18 = sphi 0, %s20
      %s21 = sphi 0, %s18
      %s22 = sphi 0, %s21
      %s38 = sphi 0, %s22
      %s42 = sphi 0, %s42
      %s44 = sphi 0, %s42
      %s45 = sphi 0, %s44
      %s59 = sphi 0, %s45
      %s65 = sphi 0, %s67
      %s68 = sphi 0, %s65
      %s69 = sphi 0, %s68
      %s85 = sphi 0, %s69
    $region4: #{tpu_custom_call.1} parent=1 // loop_header_branch
      %11 = sbr.rel (%p9) target = $region8
    $region5: #{tpu_custom_call.1} parent=1 // loop_body
      %s13 = ssub.s32 %s8, 1
      %s14 = ssub.s32 %s8, 2
      %s15 = sadd.s32 %s8, 1
      %s16 = ssub.s32 %s8, %s15
      %p17 = scmp.eq.s32.totalorder %s16, 0
      %s19 = sadd.s32 %s18, 1
      %s20 = scalar_select %p17, %s18, %s19
      %p23 = pneg %p17
      %p24 = scmp.eq.s32.totalorder %s8, 4
      %p25 = por %p23, %p24
      %p26 = scmp.ne.s32.totalorder %s18, %s21
      %p27 = scmp.eq.s32.totalorder %s8, 0
      %p28 = por %p26, %p27
      %p29 = scmp.ne.s32.totalorder %s18, %s21
      %p30 = scmp.eq.s32.totalorder %s13, 4
      %p31 = por %p29, %p30
      %p32 = scmp.ne.s32.totalorder %s21, %s22
      %p33 = scmp.eq.s32.totalorder %s13, 0
      %p34 = por %p32, %p33
      %p35 = scmp.ne.s32.totalorder %s21, %s22
      %p36 = scmp.eq.s32.totalorder %s14, 4
      %p37 = por %p35, %p36
      %p39 = scmp.ne.s32.totalorder %s22, %s38
      %p40 = scmp.eq.s32.totalorder %s14, 0
      %p41 = por %p39, %p40
      %s43 = sadd.s32 %s42, 1
      %p46 = scmp.eq.s32.totalorder %s8, 4
      %p47 = scmp.ne.s32.totalorder %s42, %s44
      %p48 = scmp.eq.s32.totalorder %s8, 0
      %p49 = por %p47, %p48
      %p50 = scmp.ne.s32.totalorder %s42, %s44
      %p51 = scmp.eq.s32.totalorder %s13, 4
      %p52 = por %p50, %p51
      %p53 = scmp.ne.s32.totalorder %s44, %s45
      %p54 = scmp.eq.s32.totalorder %s13, 0
      %p55 = por %p53, %p54
      %p56 = scmp.ne.s32.totalorder %s44, %s45
      %p57 = scmp.eq.s32.totalorder %s14, 4
      %p58 = por %p56, %p57
      %p60 = scmp.ne.s32.totalorder %s45, %s59
      %p61 = scmp.eq.s32.totalorder %s14, 0
      %p62 = por %p60, %p61
      %s63 = ssub.s32 %s8, %s15
      %p64 = scmp.eq.s32.totalorder %s63, 0
      %s66 = sadd.s32 %s65, 1
      %s67 = scalar_select %p64, %s65, %s66
      %p70 = pneg %p64
      %p71 = scmp.eq.s32.totalorder %s8, 4
      %p72 = por %p70, %p71
      %p73 = scmp.ne.s32.totalorder %s65, %s68
      %p74 = scmp.eq.s32.totalorder %s8, 0
      %p75 = por %p73, %p74
      %p76 = scmp.ne.s32.totalorder %s65, %s68
      %p77 = scmp.eq.s32.totalorder %s13, 4
      %p78 = por %p76, %p77
      %p79 = scmp.ne.s32.totalorder %s68, %s69
      %p80 = scmp.eq.s32.totalorder %s13, 0
      %p81 = por %p79, %p80
      %p82 = scmp.ne.s32.totalorder %s68, %s69
      %p83 = scmp.eq.s32.totalorder %s14, 4
      %p84 = por %p82, %p83
      %p86 = scmp.ne.s32.totalorder %s69, %s85
      %p87 = scmp.eq.s32.totalorder %s14, 0
      %p88 = por %p86, %p87
      %p89 = scmp.le.s32.totalorder 1, %s8
      %p90 = scmp.lt.s32.totalorder %s8, 6
      %p91 = pnand %p89, %p90
      %p92 = pneg %p91
      // Predicated region
      $region9: #{tpu_custom_call.1} parent=5 // pred_check
        _
      $region10: #{tpu_custom_call.1} parent=5 // pred_check_branch
        %94 = sbr.rel (%p91) target = $region12
      $region11: #{tpu_custom_call.1} parent=5 // pred_region
        %s95 = ssub.s32 %s8, 1
        // Predicated region
        $region13: #{tpu_custom_call.1} parent=11 // pred_check
          %p96 = pneg %p55
        $region14: #{tpu_custom_call.1} parent=11 // pred_check_branch
          %98 = sbr.rel (%p96) target = $region16
        $region15: #{tpu_custom_call.1} parent=11 // pred_region
          _
        $region16: #{tpu_custom_call.1} parent=11 // pred_fallthru
          _
      $region12: #{tpu_custom_call.1} parent=5 // pred_fallthru
        _
      %p99 = scmp.lt.s32.totalorder %s8, 5
      // Predicated region
      $region17: #{tpu_custom_call.1} parent=5 // pred_check
        %p100 = pneg %p99
      $region18: #{tpu_custom_call.1} parent=5 // pred_check_branch
        %102 = sbr.rel (%p100) target = $region20
      $region19: #{tpu_custom_call.1} parent=5 // pred_region
        // Predicated region
        $region21: #{tpu_custom_call.1} parent=19 // pred_check
          %p103 = pneg %p28
        $region22: #{tpu_custom_call.1} parent=19 // pred_check_branch
          %105 = sbr.rel (%p103) target = $region24
        $region23: #{tpu_custom_call.1} parent=19 // pred_region
          %s106 = smul.u32 64, %s8
          %s107 = ssub.s32 257, %s106
          %p108 = scmp.lt.s32.totalorder %s107, 64
          %s109 = scalar_select %p108, %s107, 64
          %s110 = smul.u32 128, %s109
          %p111 = scmp.lt.s32.totalorder %s106, 256
          %s112 = scalar_select %p111, %s106, 256
          %s113 = smul.addr %s112, 8
          %s114 = scalar_lea.vmem %s0, %s113
          %s115 = smul.u32 64, %s8
          %s116 = ssub.s32 257, %s115
          %p117 = scmp.lt.s32.totalorder %s116, 64
          %s118 = scalar_select %p117, %s116, 64
          %s119 = smul.u32 128, %s118
        $region24: #{tpu_custom_call.1} parent=19 // pred_fallthru
          _
      $region20: #{tpu_custom_call.1} parent=5 // pred_fallthru
        _
      %p120 = scmp.le.s32.totalorder 1, %s8
      %p121 = scmp.lt.s32.totalorder %s8, 6
      %p122 = pnand %p120, %p121
      %p123 = pneg %p122
      // Predicated region
      $region25: #{tpu_custom_call.1} parent=5 // pred_check
        _
      $region26: #{tpu_custom_call.1} parent=5 // pred_check_branch
        %125 = sbr.rel (%p122) target = $region28
      $region27: #{tpu_custom_call.1} parent=5 // pred_region
        %s126 = ssub.s32 %s8, 1
        %s127 = smul.u32 64, %s13
        %s128 = ssub.s32 257, %s127
        %p129 = scmp.lt.s32.totalorder %s128, 64
        %s130 = scalar_select %p129, %s128, 64
        %s131 = smul.u32 128, %s130
        %p132 = scmp.lt.s32.totalorder %s127, 256
        %s133 = scalar_select %p132, %s127, 256
        %s134 = smul.addr %s133, 8
        %s135 = scalar_lea.vmem %s0, %s134
        %p136 = pneg %p34
        %p137 = pneg %p31
        %p138 = pneg %p55
        %p139 = pneg %p52
        %p140 = pneg %p81
        %p141 = pneg %p78
        %s142 = sand.u32 %s68, 1
        %s143 = sand.u32 %s68, 1
        %s144 = smul.addr %s143, 512
        %s145 = scalar_lea.vmem [#allocation2], %s144
        %s146 = smul.u32 64, %s13
        %s147 = ssub.s32 257, %s146
        %p148 = scmp.lt.s32.totalorder %s147, 64
        %s149 = scalar_select %p148, %s147, 64
        %s150 = smul.u32 128, %s149
        %p151 = scmp.lt.s32.totalorder %s146, 256
        %s152 = scalar_select %p151, %s146, 256
        %s153 = smul.addr %s152, 8
        %s154 = scalar_lea.vmem %s0, %s153
        %s155 = smul.u32 64, %s13
        %s156 = ssub.s32 257, %s155
        %p157 = scmp.lt.s32.totalorder %s156, 64
        %s158 = scalar_select %p157, %s156, 64
        %s159 = smul.u32 128, %s158
        %s160 = smul.u32 64, %s13
        %s161 = ssub.s32 257, %s160
        %p162 = scmp.lt.s32.totalorder %s161, 64
        %s163 = scalar_select %p162, %s161, 64
        %s164 = smul.u32 128, %s163
        %v165 = vld [vmem:[%s154] sm:$0xff]
        %v166 = vld [vmem:[%s154 + $0x8] sm:$0xff]
        %v167 = vld [vmem:[%s154 + $0x10] sm:$0xff]
        %v168 = vld [vmem:[%s154 + $0x18] sm:$0xff]
        %v169 = vld [vmem:[%s154 + $0x20] sm:$0xff]
        %v170 = vld [vmem:[%s154 + $0x28] sm:$0xff]
        %v171 = vld [vmem:[%s154 + $0x30] sm:$0xff]
        %v172 = vld [vmem:[%s154 + $0x38] sm:$0xff]
        %v173 = vld [vmem:[%s154 + $0x40] sm:$0xff]
        %v174 = vld [vmem:[%s154 + $0x48] sm:$0xff]
        %v175 = vld [vmem:[%s154 + $0x50] sm:$0xff]
        %v176 = vld [vmem:[%s154 + $0x58] sm:$0xff]
        %v177 = vld [vmem:[%s154 + $0x60] sm:$0xff]
        %v178 = vld [vmem:[%s154 + $0x68] sm:$0xff]
        %v179 = vld [vmem:[%s154 + $0x70] sm:$0xff]
        %v180 = vld [vmem:[%s154 + $0x78] sm:$0xff]
        %v181 = vld [vmem:[%s154 + $0x80] sm:$0xff]
        %v182 = vld [vmem:[%s154 + $0x88] sm:$0xff]
        %v183 = vld [vmem:[%s154 + $0x90] sm:$0xff]
        %v184 = vld [vmem:[%s154 + $0x98] sm:$0xff]
        %v185 = vld [vmem:[%s154 + $0xa0] sm:$0xff]
        %v186 = vld [vmem:[%s154 + $0xa8] sm:$0xff]
        %v187 = vld [vmem:[%s154 + $0xb0] sm:$0xff]
        %v188 = vld [vmem:[%s154 + $0xb8] sm:$0xff]
        %v189 = vld [vmem:[%s154 + $0xc0] sm:$0xff]
        %v190 = vld [vmem:[%s154 + $0xc8] sm:$0xff]
        %v191 = vld [vmem:[%s154 + $0xd0] sm:$0xff]
        %v192 = vld [vmem:[%s154 + $0xd8] sm:$0xff]
        %v193 = vld [vmem:[%s154 + $0xe0] sm:$0xff]
        %v194 = vld [vmem:[%s154 + $0xe8] sm:$0xff]
        %v195 = vld [vmem:[%s154 + $0xf0] sm:$0xff]
        %v196 = vld [vmem:[%s154 + $0xf8] sm:$0xff]
        %v197 = vld [vmem:[%s154 + $0x100] sm:$0xff]
        %v198 = vld [vmem:[%s154 + $0x108] sm:$0xff]
        %v199 = vld [vmem:[%s154 + $0x110] sm:$0xff]
        %v200 = vld [vmem:[%s154 + $0x118] sm:$0xff]
        %v201 = vld [vmem:[%s154 + $0x120] sm:$0xff]
        %v202 = vld [vmem:[%s154 + $0x128] sm:$0xff]
        %v203 = vld [vmem:[%s154 + $0x130] sm:$0xff]
        %v204 = vld [vmem:[%s154 + $0x138] sm:$0xff]
        %v205 = vld [vmem:[%s154 + $0x140] sm:$0xff]
        %v206 = vld [vmem:[%s154 + $0x148] sm:$0xff]
        %v207 = vld [vmem:[%s154 + $0x150] sm:$0xff]
        %v208 = vld [vmem:[%s154 + $0x158] sm:$0xff]
        %v209 = vld [vmem:[%s154 + $0x160] sm:$0xff]
        %v210 = vld [vmem:[%s154 + $0x168] sm:$0xff]
        %v211 = vld [vmem:[%s154 + $0x170] sm:$0xff]
        %v212 = vld [vmem:[%s154 + $0x178] sm:$0xff]
        %v213 = vld [vmem:[%s154 + $0x180] sm:$0xff]
        %v214 = vld [vmem:[%s154 + $0x188] sm:$0xff]
        %v215 = vld [vmem:[%s154 + $0x190] sm:$0xff]
        %v216 = vld [vmem:[%s154 + $0x198] sm:$0xff]
        %v217 = vld [vmem:[%s154 + $0x1a0] sm:$0xff]
        %v218 = vld [vmem:[%s154 + $0x1a8] sm:$0xff]
        %v219 = vld [vmem:[%s154 + $0x1b0] sm:$0xff]
        %v220 = vld [vmem:[%s154 + $0x1b8] sm:$0xff]
        %v221 = vld [vmem:[%s154 + $0x1c0] sm:$0xff]
        %v222 = vld [vmem:[%s154 + $0x1c8] sm:$0xff]
        %v223 = vld [vmem:[%s154 + $0x1d0] sm:$0xff]
        %v224 = vld [vmem:[%s154 + $0x1d8] sm:$0xff]
        %v225 = vld [vmem:[%s154 + $0x1e0] sm:$0xff]
        %v226 = vld [vmem:[%s154 + $0x1e8] sm:$0xff]
        %v227 = vld [vmem:[%s154 + $0x1f0] sm:$0xff]
        %v228 = vld [vmem:[%s154 + $0x1f8] sm:$0xff]
        %v229 = vld [vmem:[%s1] sm:$0xff]
        %vm230 = vcmask 64512
        %v232 = vsel %vm230, %v165, 0
        %v235 = vsel %vm230, %v166, 0
        %v238 = vsel %vm230, %v167, 0
        %v241 = vsel %vm230, %v168, 0
        %v244 = vsel %vm230, %v169, 0
        %v247 = vsel %vm230, %v170, 0
        %v250 = vsel %vm230, %v171, 0
        %v253 = vsel %vm230, %v172, 0
        %v256 = vsel %vm230, %v173, 0
        %v259 = vsel %vm230, %v174, 0
        %v262 = vsel %vm230, %v175, 0
        %v265 = vsel %vm230, %v176, 0
        %v268 = vsel %vm230, %v177, 0
        %v271 = vsel %vm230, %v178, 0
        %v274 = vsel %vm230, %v179, 0
        %v277 = vsel %vm230, %v180, 0
        %v280 = vsel %vm230, %v181, 0
        %v283 = vsel %vm230, %v182, 0
        %v286 = vsel %vm230, %v183, 0
        %v289 = vsel %vm230, %v184, 0
        %v292 = vsel %vm230, %v185, 0
        %v295 = vsel %vm230, %v186, 0
        %v298 = vsel %vm230, %v187, 0
        %v301 = vsel %vm230, %v188, 0
        %v304 = vsel %vm230, %v189, 0
        %v307 = vsel %vm230, %v190, 0
        %v310 = vsel %vm230, %v191, 0
        %v313 = vsel %vm230, %v192, 0
        %v316 = vsel %vm230, %v193, 0
        %v319 = vsel %vm230, %v194, 0
        %v322 = vsel %vm230, %v195, 0
        %v325 = vsel %vm230, %v196, 0
        %v328 = vsel %vm230, %v197, 0
        %v331 = vsel %vm230, %v198, 0
        %v334 = vsel %vm230, %v199, 0
        %v337 = vsel %vm230, %v200, 0
        %v340 = vsel %vm230, %v201, 0
        %v343 = vsel %vm230, %v202, 0
        %v346 = vsel %vm230, %v203, 0
        %v349 = vsel %vm230, %v204, 0
        %v352 = vsel %vm230, %v205, 0
        %v355 = vsel %vm230, %v206, 0
        %v358 = vsel %vm230, %v207, 0
        %v361 = vsel %vm230, %v208, 0
        %v364 = vsel %vm230, %v209, 0
        %v367 = vsel %vm230, %v210, 0
        %v370 = vsel %vm230, %v211, 0
        %v373 = vsel %vm230, %v212, 0
        %v376 = vsel %vm230, %v213, 0
        %v379 = vsel %vm230, %v214, 0
        %v382 = vsel %vm230, %v215, 0
        %v385 = vsel %vm230, %v216, 0
        %v388 = vsel %vm230, %v217, 0
        %v391 = vsel %vm230, %v218, 0
        %v394 = vsel %vm230, %v219, 0
        %v397 = vsel %vm230, %v220, 0
        %v400 = vsel %vm230, %v221, 0
        %v403 = vsel %vm230, %v222, 0
        %v406 = vsel %vm230, %v223, 0
        %v409 = vsel %vm230, %v224, 0
        %v412 = vsel %vm230, %v225, 0
        %v415 = vsel %vm230, %v226, 0
        %v418 = vsel %vm230, %v227, 0
        %v421 = vsel %vm230, %v228, 0
        %423 = vmatprep.subr.mxu0 0.0
        %424 = vmatpush1.msra.mxu0 %v229
        %425 = vmatprep.subr.mxu0 0.0
        %426 = vmatpush1.msra.mxu0 0.0
        %427 = vmatprep.subr.mxu0 0.0
        %428 = vmatpush1.msra.mxu0 0.0
        %429 = vmatprep.subr.mxu0 0.0
        %430 = vmatpush1.msra.mxu0 0.0
        %431 = vmatprep.subr.mxu0 0.0
        %432 = vmatpush1.msra.mxu0 0.0
        %433 = vmatprep.subr.mxu0 0.0
        %434 = vmatpush1.msra.mxu0 0.0
        %435 = vmatprep.subr.mxu0 0.0
        %436 = vmatpush1.msra.mxu0 0.0
        %437 = vmatprep.subr.mxu0 0.0
        %438 = vmatpush1.msra.mxu0 0.0
        %439 = vmatprep.subr.mxu0 0.0
        %440 = vmatpush1.msra.mxu0 0.0
        %441 = vmatprep.subr.mxu0 0.0
        %442 = vmatpush1.msra.mxu0 0.0
        %443 = vmatprep.subr.mxu0 0.0
        %444 = vmatpush1.msra.mxu0 0.0
        %445 = vmatprep.subr.mxu0 0.0
        %446 = vmatpush1.msra.mxu0 0.0
        %447 = vmatprep.subr.mxu0 0.0
        %448 = vmatpush1.msra.mxu0 0.0
        %449 = vmatprep.subr.mxu0 0.0
        %450 = vmatpush1.msra.mxu0 0.0
        %451 = vmatprep.subr.mxu0 0.0
        %452 = vmatpush1.msra.mxu0 0.0
        %453 = vmatprep.subr.mxu0 0.0
        %454 = vmatpush1.msra.mxu0 0.0
        %455 = vmatprep.subr.mxu0 0.0
        %456 = vmatpush1.msra.mxu0 0.0
        %457 = vmatprep.subr.mxu0 0.0
        %458 = vmatpush1.msra.mxu0 0.0
        %459 = vmatprep.subr.mxu0 0.0
        %460 = vmatpush1.msra.mxu0 0.0
        %461 = vmatprep.subr.mxu0 0.0
        %462 = vmatpush1.msra.mxu0 0.0
        %463 = vmatprep.subr.mxu0 0.0
        %464 = vmatpush1.msra.mxu0 0.0
        %465 = vmatprep.subr.mxu0 0.0
        %466 = vmatpush1.msra.mxu0 0.0
        %467 = vmatprep.subr.mxu0 0.0
        %468 = vmatpush1.msra.mxu0 0.0
        %469 = vmatprep.subr.mxu0 0.0
        %470 = vmatpush1.msra.mxu0 0.0
        %471 = vmatprep.subr.mxu0 0.0
        %472 = vmatpush1.msra.mxu0 0.0
        %473 = vmatprep.subr.mxu0 0.0
        %474 = vmatpush1.msra.mxu0 0.0
        %475 = vmatprep.subr.mxu0 0.0
        %476 = vmatpush1.msra.mxu0 0.0
        %477 = vmatprep.subr.mxu0 0.0
        %478 = vmatpush1.msra.mxu0 0.0
        %479 = vmatprep.subr.mxu0 0.0
        %480 = vmatpush1.msra.mxu0 0.0
        %481 = vmatprep.subr.mxu0 0.0
        %482 = vmatpush1.msra.mxu0 0.0
        %483 = vmatprep.subr.mxu0 0.0
        %484 = vmatpush1.msra.mxu0 0.0
        %485 = vmatprep.subr.mxu0 0.0
        %486 = vmatpush1.msra.mxu0 0.0
        %487 = vmatprep.mubr.f32.mxu0 0.0
        %488 = vmatmul.mubr.f32.gmra.mrb[0].mxu0 %v232
        %v489 = vpop.f32.mrb[0].mxu0
        %v490 = vadd.f32 0.0, %v489
        %v491 = vpop.f32.mrb[0].mxu0
        %492 = vmatprep.mubr.f32.mxu0 0.0
        %493 = vmatmul.mubr.f32.gmra.mrb[0].mxu0 %v235
        %v494 = vpop.f32.mrb[0].mxu0
        %v495 = vadd.f32 0.0, %v494
        %v496 = vpop.f32.mrb[0].mxu0
        %497 = vmatprep.mubr.f32.mxu0 0.0
        %498 = vmatmul.mubr.f32.gmra.mrb[0].mxu0 %v238
        %v499 = vpop.f32.mrb[0].mxu0
        %v500 = vadd.f32 0.0, %v499
        %v501 = vpop.f32.mrb[0].mxu0
        %502 = vmatprep.mubr.f32.mxu0 0.0
        %503 = vmatmul.mubr.f32.gmra.mrb[0].mxu0 %v241
        %v504 = vpop.f32.mrb[0].mxu0
        %v505 = vadd.f32 0.0, %v504
        %v506 = vpop.f32.mrb[0].mxu0
        %507 = vmatprep.mubr.f32.mxu0 0.0
        %508 = vmatmul.mubr.f32.gmra.mrb[0].mxu0 %v244
        %v509 = vpop.f32.mrb[0].mxu0
        %v510 = vadd.f32 0.0, %v509
        %v511 = vpop.f32.mrb[0].mxu0
        %512 = vmatprep.mubr.f32.mxu0 0.0
        %513 = vmatmul.mubr.f32.gmra.mrb[0].mxu0 %v247
        %v514 = vpop.f32.mrb[0].mxu0
        %v515 = vadd.f32 0.0, %v514
        %v516 = vpop.f32.mrb[0].mxu0
        %517 = vmatprep.mubr.f32.mxu0 0.0
        %518 = vmatmul.mubr.f32.gmra.mrb[0].mxu0 %v250
        %v519 = vpop.f32.mrb[0].mxu0
        %v520 = vadd.f32 0.0, %v519
        %v521 = vpop.f32.mrb[0].mxu0
        %522 = vmatprep.mubr.f32.mxu0 0.0
        %523 = vmatmul.mubr.f32.gmra.mrb[0].mxu0 %v253
        %v524 = vpop.f32.mrb[0].mxu0
        %v525 = vadd.f32 0.0, %v524
        %v526 = vpop.f32.mrb[0].mxu0
        %527 = vmatprep.mubr.f32.mxu0 0.0
        %528 = vmatmul.mubr.f32.gmra.mrb[0].mxu0 %v256
        %v529 = vpop.f32.mrb[0].mxu0
        %v530 = vadd.f32 0.0, %v529
        %v531 = vpop.f32.mrb[0].mxu0
        %532 = vmatprep.mubr.f32.mxu0 0.0
        %533 = vmatmul.mubr.f32.gmra.mrb[0].mxu0 %v259
        %v534 = vpop.f32.mrb[0].mxu0
        %v535 = vadd.f32 0.0, %v534
        %v536 = vpop.f32.mrb[0].mxu0
        %537 = vmatprep.mubr.f32.mxu0 0.0
        %538 = vmatmul.mubr.f32.gmra.mrb[0].mxu0 %v262
        %v539 = vpop.f32.mrb[0].mxu0
        %v540 = vadd.f32 0.0, %v539
        %v541 = vpop.f32.mrb[0].mxu0
        %542 = vmatprep.mubr.f32.mxu0 0.0
        %543 = vmatmul.mubr.f32.gmra.mrb[0].mxu0 %v265
        %v544 = vpop.f32.mrb[0].mxu0
        %v545 = vadd.f32 0.0, %v544
        %v546 = vpop.f32.mrb[0].mxu0
        %547 = vmatprep.mubr.f32.mxu0 0.0
        %548 = vmatmul.mubr.f32.gmra.mrb[0].mxu0 %v268
        %v549 = vpop.f32.mrb[0].mxu0
        %v550 = vadd.f32 0.0, %v549
        %v551 = vpop.f32.mrb[0].mxu0
        %552 = vmatprep.mubr.f32.mxu0 0.0
        %553 = vmatmul.mubr.f32.gmra.mrb[0].mxu0 %v271
        %v554 = vpop.f32.mrb[0].mxu0
        %v555 = vadd.f32 0.0, %v554
        %v556 = vpop.f32.mrb[0].mxu0
        %557 = vmatprep.mubr.f32.mxu0 0.0
        %558 = vmatmul.mubr.f32.gmra.mrb[0].mxu0 %v274
        %v559 = vpop.f32.mrb[0].mxu0
        %v560 = vadd.f32 0.0, %v559
        %v561 = vpop.f32.mrb[0].mxu0
        %562 = vmatprep.mubr.f32.mxu0 0.0
        %563 = vmatmul.mubr.f32.gmra.mrb[0].mxu0 %v277
        %v564 = vpop.f32.mrb[0].mxu0
        %v565 = vadd.f32 0.0, %v564
        %v566 = vpop.f32.mrb[0].mxu0
        %567 = vmatprep.mubr.f32.mxu0 0.0
        %568 = vmatmul.mubr.f32.gmra.mrb[0].mxu0 %v280
        %v569 = vpop.f32.mrb[0].mxu0
        %v570 = vadd.f32 0.0, %v569
        %v571 = vpop.f32.mrb[0].mxu0
        %572 = vmatprep.mubr.f32.mxu0 0.0
        %573 = vmatmul.mubr.f32.gmra.mrb[0].mxu0 %v283
        %v574 = vpop.f32.mrb[0].mxu0
        %v575 = vadd.f32 0.0, %v574
        %v576 = vpop.f32.mrb[0].mxu0
        %577 = vmatprep.mubr.f32.mxu0 0.0
        %578 = vmatmul.mubr.f32.gmra.mrb[0].mxu0 %v286
        %v579 = vpop.f32.mrb[0].mxu0
        %v580 = vadd.f32 0.0, %v579
        %v581 = vpop.f32.mrb[0].mxu0
        %582 = vmatprep.mubr.f32.mxu0 0.0
        %583 = vmatmul.mubr.f32.gmra.mrb[0].mxu0 %v289
        %v584 = vpop.f32.mrb[0].mxu0
        %v585 = vadd.f32 0.0, %v584
        %v586 = vpop.f32.mrb[0].mxu0
        %587 = vmatprep.mubr.f32.mxu0 0.0
        %588 = vmatmul.mubr.f32.gmra.mrb[0].mxu0 %v292
        %v589 = vpop.f32.mrb[0].mxu0
        %v590 = vadd.f32 0.0, %v589
        %v591 = vpop.f32.mrb[0].mxu0
        %592 = vmatprep.mubr.f32.mxu0 0.0
        %593 = vmatmul.mubr.f32.gmra.mrb[0].mxu0 %v295
        %v594 = vpop.f32.mrb[0].mxu0
        %v595 = vadd.f32 0.0, %v594
        %v596 = vpop.f32.mrb[0].mxu0
        %597 = vmatprep.mubr.f32.mxu0 0.0
        %598 = vmatmul.mubr.f32.gmra.mrb[0].mxu0 %v298
        %v599 = vpop.f32.mrb[0].mxu0
        %v600 = vadd.f32 0.0, %v599
        %v601 = vpop.f32.mrb[0].mxu0
        %602 = vmatprep.mubr.f32.mxu0 0.0
        %603 = vmatmul.mubr.f32.gmra.mrb[0].mxu0 %v301
        %v604 = vpop.f32.mrb[0].mxu0
        %v605 = vadd.f32 0.0, %v604
        %v606 = vpop.f32.mrb[0].mxu0
        %607 = vmatprep.mubr.f32.mxu0 0.0
        %608 = vmatmul.mubr.f32.gmra.mrb[0].mxu0 %v304
        %v609 = vpop.f32.mrb[0].mxu0
        %v610 = vadd.f32 0.0, %v609
        %v611 = vpop.f32.mrb[0].mxu0
        %612 = vmatprep.mubr.f32.mxu0 0.0
        %613 = vmatmul.mubr.f32.gmra.mrb[0].mxu0 %v307
        %v614 = vpop.f32.mrb[0].mxu0
        %v615 = vadd.f32 0.0, %v614
        %v616 = vpop.f32.mrb[0].mxu0
        %617 = vmatprep.mubr.f32.mxu0 0.0
        %618 = vmatmul.mubr.f32.gmra.mrb[0].mxu0 %v310
        %v619 = vpop.f32.mrb[0].mxu0
        %v620 = vadd.f32 0.0, %v619
        %v621 = vpop.f32.mrb[0].mxu0
        %622 = vmatprep.mubr.f32.mxu0 0.0
        %623 = vmatmul.mubr.f32.gmra.mrb[0].mxu0 %v313
        %v624 = vpop.f32.mrb[0].mxu0
        %v625 = vadd.f32 0.0, %v624
        %v626 = vpop.f32.mrb[0].mxu0
        %627 = vmatprep.mubr.f32.mxu0 0.0
        %628 = vmatmul.mubr.f32.gmra.mrb[0].mxu0 %v316
        %v629 = vpop.f32.mrb[0].mxu0
        %v630 = vadd.f32 0.0, %v629
        %v631 = vpop.f32.mrb[0].mxu0
        %632 = vmatprep.mubr.f32.mxu0 0.0
        %633 = vmatmul.mubr.f32.gmra.mrb[0].mxu0 %v319
        %v634 = vpop.f32.mrb[0].mxu0
        %v635 = vadd.f32 0.0, %v634
        %v636 = vpop.f32.mrb[0].mxu0
        %637 = vmatprep.mubr.f32.mxu0 0.0
        %638 = vmatmul.mubr.f32.gmra.mrb[0].mxu0 %v322
        %v639 = vpop.f32.mrb[0].mxu0
        %v640 = vadd.f32 0.0, %v639
        %v641 = vpop.f32.mrb[0].mxu0
        %642 = vmatprep.mubr.f32.mxu0 0.0
        %643 = vmatmul.mubr.f32.gmra.mrb[0].mxu0 %v325
        %v644 = vpop.f32.mrb[0].mxu0
        %v645 = vadd.f32 0.0, %v644
        %v646 = vpop.f32.mrb[0].mxu0
        %647 = vmatprep.mubr.f32.mxu0 0.0
        %648 = vmatmul.mubr.f32.gmra.mrb[0].mxu0 %v328
        %v649 = vpop.f32.mrb[0].mxu0
        %v650 = vadd.f32 0.0, %v649
        %v651 = vpop.f32.mrb[0].mxu0
        %652 = vmatprep.mubr.f32.mxu0 0.0
        %653 = vmatmul.mubr.f32.gmra.mrb[0].mxu0 %v331
        %v654 = vpop.f32.mrb[0].mxu0
        %v655 = vadd.f32 0.0, %v654
        %v656 = vpop.f32.mrb[0].mxu0
        %657 = vmatprep.mubr.f32.mxu0 0.0
        %658 = vmatmul.mubr.f32.gmra.mrb[0].mxu0 %v334
        %v659 = vpop.f32.mrb[0].mxu0
        %v660 = vadd.f32 0.0, %v659
        %v661 = vpop.f32.mrb[0].mxu0
        %662 = vmatprep.mubr.f32.mxu0 0.0
        %663 = vmatmul.mubr.f32.gmra.mrb[0].mxu0 %v337
        %v664 = vpop.f32.mrb[0].mxu0
        %v665 = vadd.f32 0.0, %v664
        %v666 = vpop.f32.mrb[0].mxu0
        %667 = vmatprep.mubr.f32.mxu0 0.0
        %668 = vmatmul.mubr.f32.gmra.mrb[0].mxu0 %v340
        %v669 = vpop.f32.mrb[0].mxu0
        %v670 = vadd.f32 0.0, %v669
        %v671 = vpop.f32.mrb[0].mxu0
        %672 = vmatprep.mubr.f32.mxu0 0.0
        %673 = vmatmul.mubr.f32.gmra.mrb[0].mxu0 %v343
        %v674 = vpop.f32.mrb[0].mxu0
        %v675 = vadd.f32 0.0, %v674
        %v676 = vpop.f32.mrb[0].mxu0
        %677 = vmatprep.mubr.f32.mxu0 0.0
        %678 = vmatmul.mubr.f32.gmra.mrb[0].mxu0 %v346
        %v679 = vpop.f32.mrb[0].mxu0
        %v680 = vadd.f32 0.0, %v679
        %v681 = vpop.f32.mrb[0].mxu0
        %682 = vmatprep.mubr.f32.mxu0 0.0
        %683 = vmatmul.mubr.f32.gmra.mrb[0].mxu0 %v349
        %v684 = vpop.f32.mrb[0].mxu0
        %v685 = vadd.f32 0.0, %v684
        %v686 = vpop.f32.mrb[0].mxu0
        %687 = vmatprep.mubr.f32.mxu0 0.0
        %688 = vmatmul.mubr.f32.gmra.mrb[0].mxu0 %v352
        %v689 = vpop.f32.mrb[0].mxu0
        %v690 = vadd.f32 0.0, %v689
        %v691 = vpop.f32.mrb[0].mxu0
        %692 = vmatprep.mubr.f32.mxu0 0.0
        %693 = vmatmul.mubr.f32.gmra.mrb[0].mxu0 %v355
        %v694 = vpop.f32.mrb[0].mxu0
        %v695 = vadd.f32 0.0, %v694
        %v696 = vpop.f32.mrb[0].mxu0
        %697 = vmatprep.mubr.f32.mxu0 0.0
        %698 = vmatmul.mubr.f32.gmra.mrb[0].mxu0 %v358
        %v699 = vpop.f32.mrb[0].mxu0
        %v700 = vadd.f32 0.0, %v699
        %v701 = vpop.f32.mrb[0].mxu0
        %702 = vmatprep.mubr.f32.mxu0 0.0
        %703 = vmatmul.mubr.f32.gmra.mrb[0].mxu0 %v361
        %v704 = vpop.f32.mrb[0].mxu0
        %v705 = vadd.f32 0.0, %v704
        %v706 = vpop.f32.mrb[0].mxu0
        %707 = vmatprep.mubr.f32.mxu0 0.0
        %708 = vmatmul.mubr.f32.gmra.mrb[0].mxu0 %v364
        %v709 = vpop.f32.mrb[0].mxu0
        %v710 = vadd.f32 0.0, %v709
        %v711 = vpop.f32.mrb[0].mxu0
        %712 = vmatprep.mubr.f32.mxu0 0.0
        %713 = vmatmul.mubr.f32.gmra.mrb[0].mxu0 %v367
        %v714 = vpop.f32.mrb[0].mxu0
        %v715 = vadd.f32 0.0, %v714
        %v716 = vpop.f32.mrb[0].mxu0
        %717 = vmatprep.mubr.f32.mxu0 0.0
        %718 = vmatmul.mubr.f32.gmra.mrb[0].mxu0 %v370
        %v719 = vpop.f32.mrb[0].mxu0
        %v720 = vadd.f32 0.0, %v719
        %v721 = vpop.f32.mrb[0].mxu0
        %722 = vmatprep.mubr.f32.mxu0 0.0
        %723 = vmatmul.mubr.f32.gmra.mrb[0].mxu0 %v373
        %v724 = vpop.f32.mrb[0].mxu0
        %v725 = vadd.f32 0.0, %v724
        %v726 = vpop.f32.mrb[0].mxu0
        %727 = vmatprep.mubr.f32.mxu0 0.0
        %728 = vmatmul.mubr.f32.gmra.mrb[0].mxu0 %v376
        %v729 = vpop.f32.mrb[0].mxu0
        %v730 = vadd.f32 0.0, %v729
        %v731 = vpop.f32.mrb[0].mxu0
        %732 = vmatprep.mubr.f32.mxu0 0.0
        %733 = vmatmul.mubr.f32.gmra.mrb[0].mxu0 %v379
        %v734 = vpop.f32.mrb[0].mxu0
        %v735 = vadd.f32 0.0, %v734
        %v736 = vpop.f32.mrb[0].mxu0
        %737 = vmatprep.mubr.f32.mxu0 0.0
        %738 = vmatmul.mubr.f32.gmra.mrb[0].mxu0 %v382
        %v739 = vpop.f32.mrb[0].mxu0
        %v740 = vadd.f32 0.0, %v739
        %v741 = vpop.f32.mrb[0].mxu0
        %742 = vmatprep.mubr.f32.mxu0 0.0
        %743 = vmatmul.mubr.f32.gmra.mrb[0].mxu0 %v385
        %v744 = vpop.f32.mrb[0].mxu0
        %v745 = vadd.f32 0.0, %v744
        %v746 = vpop.f32.mrb[0].mxu0
        %747 = vmatprep.mubr.f32.mxu0 0.0
        %748 = vmatmul.mubr.f32.gmra.mrb[0].mxu0 %v388
        %v749 = vpop.f32.mrb[0].mxu0
        %v750 = vadd.f32 0.0, %v749
        %v751 = vpop.f32.mrb[0].mxu0
        %752 = vmatprep.mubr.f32.mxu0 0.0
        %753 = vmatmul.mubr.f32.gmra.mrb[0].mxu0 %v391
        %v754 = vpop.f32.mrb[0].mxu0
        %v755 = vadd.f32 0.0, %v754
        %v756 = vpop.f32.mrb[0].mxu0
        %757 = vmatprep.mubr.f32.mxu0 0.0
        %758 = vmatmul.mubr.f32.gmra.mrb[0].mxu0 %v394
        %v759 = vpop.f32.mrb[0].mxu0
        %v760 = vadd.f32 0.0, %v759
        %v761 = vpop.f32.mrb[0].mxu0
        %762 = vmatprep.mubr.f32.mxu0 0.0
        %763 = vmatmul.mubr.f32.gmra.mrb[0].mxu0 %v397
        %v764 = vpop.f32.mrb[0].mxu0
        %v765 = vadd.f32 0.0, %v764
        %v766 = vpop.f32.mrb[0].mxu0
        %767 = vmatprep.mubr.f32.mxu0 0.0
        %768 = vmatmul.mubr.f32.gmra.mrb[0].mxu0 %v400
        %v769 = vpop.f32.mrb[0].mxu0
        %v770 = vadd.f32 0.0, %v769
        %v771 = vpop.f32.mrb[0].mxu0
        %772 = vmatprep.mubr.f32.mxu0 0.0
        %773 = vmatmul.mubr.f32.gmra.mrb[0].mxu0 %v403
        %v774 = vpop.f32.mrb[0].mxu0
        %v775 = vadd.f32 0.0, %v774
        %v776 = vpop.f32.mrb[0].mxu0
        %777 = vmatprep.mubr.f32.mxu0 0.0
        %778 = vmatmul.mubr.f32.gmra.mrb[0].mxu0 %v406
        %v779 = vpop.f32.mrb[0].mxu0
        %v780 = vadd.f32 0.0, %v779
        %v781 = vpop.f32.mrb[0].mxu0
        %782 = vmatprep.mubr.f32.mxu0 0.0
        %783 = vmatmul.mubr.f32.gmra.mrb[0].mxu0 %v409
        %v784 = vpop.f32.mrb[0].mxu0
        %v785 = vadd.f32 0.0, %v784
        %v786 = vpop.f32.mrb[0].mxu0
        %787 = vmatprep.mubr.f32.mxu0 0.0
        %788 = vmatmul.mubr.f32.gmra.mrb[0].mxu0 %v412
        %v789 = vpop.f32.mrb[0].mxu0
        %v790 = vadd.f32 0.0, %v789
        %v791 = vpop.f32.mrb[0].mxu0
        %792 = vmatprep.mubr.f32.mxu0 0.0
        %793 = vmatmul.mubr.f32.gmra.mrb[0].mxu0 %v415
        %v794 = vpop.f32.mrb[0].mxu0
        %v795 = vadd.f32 0.0, %v794
        %v796 = vpop.f32.mrb[0].mxu0
        %797 = vmatprep.mubr.f32.mxu0 0.0
        %798 = vmatmul.mubr.f32.gmra.mrb[0].mxu0 %v418
        %v799 = vpop.f32.mrb[0].mxu0
        %v800 = vadd.f32 0.0, %v799
        %v801 = vpop.f32.mrb[0].mxu0
        %802 = vmatprep.mubr.f32.mxu0 0.0
        %803 = vmatmul.mubr.f32.gmra.mrb[0].mxu0 %v421
        %v804 = vpop.f32.mrb[0].mxu0
        %v805 = vadd.f32 0.0, %v804
        %v806 = vpop.f32.mrb[0].mxu0
        %807 = vdwg.mxu0
        %vm808 = vcmask 15360
        %809 = vst.msk [vmem:[%s145] sm:$0xff] %vm808, %v490
        %810 = vst.msk [vmem:[%s145 + $0x8] sm:$0xff] %vm808, %v495
        %811 = vst.msk [vmem:[%s145 + $0x10] sm:$0xff] %vm808, %v500
        %812 = vst.msk [vmem:[%s145 + $0x18] sm:$0xff] %vm808, %v505
        %813 = vst.msk [vmem:[%s145 + $0x20] sm:$0xff] %vm808, %v510
        %814 = vst.msk [vmem:[%s145 + $0x28] sm:$0xff] %vm808, %v515
        %815 = vst.msk [vmem:[%s145 + $0x30] sm:$0xff] %vm808, %v520
        %816 = vst.msk [vmem:[%s145 + $0x38] sm:$0xff] %vm808, %v525
        %817 = vst.msk [vmem:[%s145 + $0x40] sm:$0xff] %vm808, %v530
        %818 = vst.msk [vmem:[%s145 + $0x48] sm:$0xff] %vm808, %v535
        %819 = vst.msk [vmem:[%s145 + $0x50] sm:$0xff] %vm808, %v540
        %820 = vst.msk [vmem:[%s145 + $0x58] sm:$0xff] %vm808, %v545
        %821 = vst.msk [vmem:[%s145 + $0x60] sm:$0xff] %vm808, %v550
        %822 = vst.msk [vmem:[%s145 + $0x68] sm:$0xff] %vm808, %v555
        %823 = vst.msk [vmem:[%s145 + $0x70] sm:$0xff] %vm808, %v560
        %824 = vst.msk [vmem:[%s145 + $0x78] sm:$0xff] %vm808, %v565
        %825 = vst.msk [vmem:[%s145 + $0x80] sm:$0xff] %vm808, %v570
        %826 = vst.msk [vmem:[%s145 + $0x88] sm:$0xff] %vm808, %v575
        %827 = vst.msk [vmem:[%s145 + $0x90] sm:$0xff] %vm808, %v580
        %828 = vst.msk [vmem:[%s145 + $0x98] sm:$0xff] %vm808, %v585
        %829 = vst.msk [vmem:[%s145 + $0xa0] sm:$0xff] %vm808, %v590
        %830 = vst.msk [vmem:[%s145 + $0xa8] sm:$0xff] %vm808, %v595
        %831 = vst.msk [vmem:[%s145 + $0xb0] sm:$0xff] %vm808, %v600
        %832 = vst.msk [vmem:[%s145 + $0xb8] sm:$0xff] %vm808, %v605
        %833 = vst.msk [vmem:[%s145 + $0xc0] sm:$0xff] %vm808, %v610
        %834 = vst.msk [vmem:[%s145 + $0xc8] sm:$0xff] %vm808, %v615
        %835 = vst.msk [vmem:[%s145 + $0xd0] sm:$0xff] %vm808, %v620
        %836 = vst.msk [vmem:[%s145 + $0xd8] sm:$0xff] %vm808, %v625
        %837 = vst.msk [vmem:[%s145 + $0xe0] sm:$0xff] %vm808, %v630
        %838 = vst.msk [vmem:[%s145 + $0xe8] sm:$0xff] %vm808, %v635
        %839 = vst.msk [vmem:[%s145 + $0xf0] sm:$0xff] %vm808, %v640
        %840 = vst.msk [vmem:[%s145 + $0xf8] sm:$0xff] %vm808, %v645
        %841 = vst.msk [vmem:[%s145 + $0x100] sm:$0xff] %vm808, %v650
        %842 = vst.msk [vmem:[%s145 + $0x108] sm:$0xff] %vm808, %v655
        %843 = vst.msk [vmem:[%s145 + $0x110] sm:$0xff] %vm808, %v660
        %844 = vst.msk [vmem:[%s145 + $0x118] sm:$0xff] %vm808, %v665
        %845 = vst.msk [vmem:[%s145 + $0x120] sm:$0xff] %vm808, %v670
        %846 = vst.msk [vmem:[%s145 + $0x128] sm:$0xff] %vm808, %v675
        %847 = vst.msk [vmem:[%s145 + $0x130] sm:$0xff] %vm808, %v680
        %848 = vst.msk [vmem:[%s145 + $0x138] sm:$0xff] %vm808, %v685
        %849 = vst.msk [vmem:[%s145 + $0x140] sm:$0xff] %vm808, %v690
        %850 = vst.msk [vmem:[%s145 + $0x148] sm:$0xff] %vm808, %v695
        %851 = vst.msk [vmem:[%s145 + $0x150] sm:$0xff] %vm808, %v700
        %852 = vst.msk [vmem:[%s145 + $0x158] sm:$0xff] %vm808, %v705
        %853 = vst.msk [vmem:[%s145 + $0x160] sm:$0xff] %vm808, %v710
        %854 = vst.msk [vmem:[%s145 + $0x168] sm:$0xff] %vm808, %v715
        %855 = vst.msk [vmem:[%s145 + $0x170] sm:$0xff] %vm808, %v720
        %856 = vst.msk [vmem:[%s145 + $0x178] sm:$0xff] %vm808, %v725
        %857 = vst.msk [vmem:[%s145 + $0x180] sm:$0xff] %vm808, %v730
        %858 = vst.msk [vmem:[%s145 + $0x188] sm:$0xff] %vm808, %v735
        %859 = vst.msk [vmem:[%s145 + $0x190] sm:$0xff] %vm808, %v740
        %860 = vst.msk [vmem:[%s145 + $0x198] sm:$0xff] %vm808, %v745
        %861 = vst.msk [vmem:[%s145 + $0x1a0] sm:$0xff] %vm808, %v750
        %862 = vst.msk [vmem:[%s145 + $0x1a8] sm:$0xff] %vm808, %v755
        %863 = vst.msk [vmem:[%s145 + $0x1b0] sm:$0xff] %vm808, %v760
        %864 = vst.msk [vmem:[%s145 + $0x1b8] sm:$0xff] %vm808, %v765
        %865 = vst.msk [vmem:[%s145 + $0x1c0] sm:$0xff] %vm808, %v770
        %866 = vst.msk [vmem:[%s145 + $0x1c8] sm:$0xff] %vm808, %v775
        %867 = vst.msk [vmem:[%s145 + $0x1d0] sm:$0xff] %vm808, %v780
        %868 = vst.msk [vmem:[%s145 + $0x1d8] sm:$0xff] %vm808, %v785
        %869 = vst.msk [vmem:[%s145 + $0x1e0] sm:$0xff] %vm808, %v790
        %870 = vst.msk [vmem:[%s145 + $0x1e8] sm:$0xff] %vm808, %v795
        %871 = vst.msk [vmem:[%s145 + $0x1f0] sm:$0xff] %vm808, %v800
        %872 = vst.msk [vmem:[%s145 + $0x1f8] sm:$0xff] %vm808, %v805
        %s873 = sand.u32 %s68, 1
        %s874 = sand.u32 %s68, 1
        %s875 = smul.addr %s874, 512
        %s876 = scalar_lea.vmem [#allocation2], %s875
        // Predicated region
        $region29: #{tpu_custom_call.1} parent=27 // pred_check
          %p877 = pneg %p78
        $region30: #{tpu_custom_call.1} parent=27 // pred_check_branch
          %879 = sbr.rel (%p877) target = $region32
        $region31: #{tpu_custom_call.1} parent=27 // pred_region
          %s880 = smul.u32 64, %s13
          %s881 = ssub.s32 257, %s880
          %p882 = scmp.lt.s32.totalorder %s881, 64
          %s883 = scalar_select %p882, %s881, 64
          %s884 = smul.u32 128, %s883
          %p885 = scmp.ne.s32.totalorder 0, %s884
          %s886 = smul.addr %s880, 8
          %s887 = scalar_lea.vmem %s2, %s886
          // Predicated region
          $region33: #{tpu_custom_call.1} parent=31 // pred_check
            %p888 = pneg %p885
          $region34: #{tpu_custom_call.1} parent=31 // pred_check_branch
            %890 = sbr.rel (%p888) target = $region36
          $region35: #{tpu_custom_call.1} parent=31 // pred_region
            // Predicated region
            $region37: #{tpu_custom_call.1} parent=35 // pred_check
              _
            $region38: #{tpu_custom_call.1} parent=35 // pred_check_branch
              %892 = sbr.rel (0) target = $region40
            $region39: #{tpu_custom_call.1} parent=35 // pred_region
              // Predicated region
              $region59: #{tpu_custom_call.1} parent=39 // pred_check
                _
              $region60: #{tpu_custom_call.1} parent=39 // pred_check_branch
                %1067 = sbr.rel (0) target = $region62
              $region61: #{tpu_custom_call.1} parent=39 // pred_region
                %s1068 = sshrl.u32 %s883, 6
                // While loop
                $region63: #{tpu_custom_call.1} parent=61 // loop_pre_header
                  _
                $region64: #{tpu_custom_call.1} parent=61 // loop_header
                  %s1070 = sphi 0, %s1072
                  %p1071 = scmp.ge.s32.totalorder %s1070, %s1068
                  %s1075 = sphi 0, %s1208
                  %s1076 = sphi %s876, %s1211
                  %s1077 = sphi %s887, %s1212
                $region65: #{tpu_custom_call.1} parent=61 // loop_header_branch
                  %1074 = sbr.rel (%p1071) target = $region69
                $region66: #{tpu_custom_call.1} parent=61 // loop_body
                  %v1078 = vld [vmem:[%s1076] sm:$0xff]
                  %1079 = vst [vmem:[%s1077] sm:$0xff] %v1078
                  %v1080 = vld [vmem:[%s1076 + $0x8] sm:$0xff]
                  %1081 = vst [vmem:[%s1077 + $0x8] sm:$0xff] %v1080
                  %v1082 = vld [vmem:[%s1076 + $0x10] sm:$0xff]
                  %1083 = vst [vmem:[%s1077 + $0x10] sm:$0xff] %v1082
                  %v1084 = vld [vmem:[%s1076 + $0x18] sm:$0xff]
                  %1085 = vst [vmem:[%s1077 + $0x18] sm:$0xff] %v1084
                  %v1086 = vld [vmem:[%s1076 + $0x20] sm:$0xff]
                  %1087 = vst [vmem:[%s1077 + $0x20] sm:$0xff] %v1086
                  %v1088 = vld [vmem:[%s1076 + $0x28] sm:$0xff]
                  %1089 = vst [vmem:[%s1077 + $0x28] sm:$0xff] %v1088
                  %v1090 = vld [vmem:[%s1076 + $0x30] sm:$0xff]
                  %1091 = vst [vmem:[%s1077 + $0x30] sm:$0xff] %v1090
                  %v1092 = vld [vmem:[%s1076 + $0x38] sm:$0xff]
                  %1093 = vst [vmem:[%s1077 + $0x38] sm:$0xff] %v1092
                  %v1094 = vld [vmem:[%s1076 + $0x40] sm:$0xff]
                  %1095 = vst [vmem:[%s1077 + $0x40] sm:$0xff] %v1094
                  %v1096 = vld [vmem:[%s1076 + $0x48] sm:$0xff]
                  %1097 = vst [vmem:[%s1077 + $0x48] sm:$0xff] %v1096
                  %v1098 = vld [vmem:[%s1076 + $0x50] sm:$0xff]
                  %1099 = vst [vmem:[%s1077 + $0x50] sm:$0xff] %v1098
                  %v1100 = vld [vmem:[%s1076 + $0x58] sm:$0xff]
                  %1101 = vst [vmem:[%s1077 + $0x58] sm:$0xff] %v1100
                  %v1102 = vld [vmem:[%s1076 + $0x60] sm:$0xff]
                  %1103 = vst [vmem:[%s1077 + $0x60] sm:$0xff] %v1102
                  %v1104 = vld [vmem:[%s1076 + $0x68] sm:$0xff]
                  %1105 = vst [vmem:[%s1077 + $0x68] sm:$0xff] %v1104
                  %v1106 = vld [vmem:[%s1076 + $0x70] sm:$0xff]
                  %1107 = vst [vmem:[%s1077 + $0x70] sm:$0xff] %v1106
                  %v1108 = vld [vmem:[%s1076 + $0x78] sm:$0xff]
                  %1109 = vst [vmem:[%s1077 + $0x78] sm:$0xff] %v1108
                  %v1110 = vld [vmem:[%s1076 + $0x80] sm:$0xff]
                  %1111 = vst [vmem:[%s1077 + $0x80] sm:$0xff] %v1110
                  %v1112 = vld [vmem:[%s1076 + $0x88] sm:$0xff]
                  %1113 = vst [vmem:[%s1077 + $0x88] sm:$0xff] %v1112
                  %v1114 = vld [vmem:[%s1076 + $0x90] sm:$0xff]
                  %1115 = vst [vmem:[%s1077 + $0x90] sm:$0xff] %v1114
                  %v1116 = vld [vmem:[%s1076 + $0x98] sm:$0xff]
                  %1117 = vst [vmem:[%s1077 + $0x98] sm:$0xff] %v1116
                  %v1118 = vld [vmem:[%s1076 + $0xa0] sm:$0xff]
                  %1119 = vst [vmem:[%s1077 + $0xa0] sm:$0xff] %v1118
                  %v1120 = vld [vmem:[%s1076 + $0xa8] sm:$0xff]
                  %1121 = vst [vmem:[%s1077 + $0xa8] sm:$0xff] %v1120
                  %v1122 = vld [vmem:[%s1076 + $0xb0] sm:$0xff]
                  %1123 = vst [vmem:[%s1077 + $0xb0] sm:$0xff] %v1122
                  %v1124 = vld [vmem:[%s1076 + $0xb8] sm:$0xff]
                  %1125 = vst [vmem:[%s1077 + $0xb8] sm:$0xff] %v1124
                  %v1126 = vld [vmem:[%s1076 + $0xc0] sm:$0xff]
                  %1127 = vst [vmem:[%s1077 + $0xc0] sm:$0xff] %v1126
                  %v1128 = vld [vmem:[%s1076 + $0xc8] sm:$0xff]
                  %1129 = vst [vmem:[%s1077 + $0xc8] sm:$0xff] %v1128
                  %v1130 = vld [vmem:[%s1076 + $0xd0] sm:$0xff]
                  %1131 = vst [vmem:[%s1077 + $0xd0] sm:$0xff] %v1130
                  %v1132 = vld [vmem:[%s1076 + $0xd8] sm:$0xff]
                  %1133 = vst [vmem:[%s1077 + $0xd8] sm:$0xff] %v1132
                  %v1134 = vld [vmem:[%s1076 + $0xe0] sm:$0xff]
                  %1135 = vst [vmem:[%s1077 + $0xe0] sm:$0xff] %v1134
                  %v1136 = vld [vmem:[%s1076 + $0xe8] sm:$0xff]
                  %1137 = vst [vmem:[%s1077 + $0xe8] sm:$0xff] %v1136
                  %v1138 = vld [vmem:[%s1076 + $0xf0] sm:$0xff]
                  %1139 = vst [vmem:[%s1077 + $0xf0] sm:$0xff] %v1138
                  %v1140 = vld [vmem:[%s1076 + $0xf8] sm:$0xff]
                  %1141 = vst [vmem:[%s1077 + $0xf8] sm:$0xff] %v1140
                  %v1142 = vld [vmem:[%s1076 + $0x100] sm:$0xff]
                  %1143 = vst [vmem:[%s1077 + $0x100] sm:$0xff] %v1142
                  %v1144 = vld [vmem:[%s1076 + $0x108] sm:$0xff]
                  %1145 = vst [vmem:[%s1077 + $0x108] sm:$0xff] %v1144
                  %v1146 = vld [vmem:[%s1076 + $0x110] sm:$0xff]
                  %1147 = vst [vmem:[%s1077 + $0x110] sm:$0xff] %v1146
                  %v1148 = vld [vmem:[%s1076 + $0x118] sm:$0xff]
                  %1149 = vst [vmem:[%s1077 + $0x118] sm:$0xff] %v1148
                  %v1150 = vld [vmem:[%s1076 + $0x120] sm:$0xff]
                  %1151 = vst [vmem:[%s1077 + $0x120] sm:$0xff] %v1150
                  %v1152 = vld [vmem:[%s1076 + $0x128] sm:$0xff]
                  %1153 = vst [vmem:[%s1077 + $0x128] sm:$0xff] %v1152
                  %v1154 = vld [vmem:[%s1076 + $0x130] sm:$0xff]
                  %1155 = vst [vmem:[%s1077 + $0x130] sm:$0xff] %v1154
                  %v1156 = vld [vmem:[%s1076 + $0x138] sm:$0xff]
                  %1157 = vst [vmem:[%s1077 + $0x138] sm:$0xff] %v1156
                  %v1158 = vld [vmem:[%s1076 + $0x140] sm:$0xff]
                  %1159 = vst [vmem:[%s1077 + $0x140] sm:$0xff] %v1158
                  %v1160 = vld [vmem:[%s1076 + $0x148] sm:$0xff]
                  %1161 = vst [vmem:[%s1077 + $0x148] sm:$0xff] %v1160
                  %v1162 = vld [vmem:[%s1076 + $0x150] sm:$0xff]
                  %1163 = vst [vmem:[%s1077 + $0x150] sm:$0xff] %v1162
                  %v1164 = vld [vmem:[%s1076 + $0x158] sm:$0xff]
                  %1165 = vst [vmem:[%s1077 + $0x158] sm:$0xff] %v1164
                  %v1166 = vld [vmem:[%s1076 + $0x160] sm:$0xff]
                  %1167 = vst [vmem:[%s1077 + $0x160] sm:$0xff] %v1166
                  %v1168 = vld [vmem:[%s1076 + $0x168] sm:$0xff]
                  %1169 = vst [vmem:[%s1077 + $0x168] sm:$0xff] %v1168
                  %v1170 = vld [vmem:[%s1076 + $0x170] sm:$0xff]
                  %1171 = vst [vmem:[%s1077 + $0x170] sm:$0xff] %v1170
                  %v1172 = vld [vmem:[%s1076 + $0x178] sm:$0xff]
                  %1173 = vst [vmem:[%s1077 + $0x178] sm:$0xff] %v1172
                  %v1174 = vld [vmem:[%s1076 + $0x180] sm:$0xff]
                  %1175 = vst [vmem:[%s1077 + $0x180] sm:$0xff] %v1174
                  %v1176 = vld [vmem:[%s1076 + $0x188] sm:$0xff]
                  %1177 = vst [vmem:[%s1077 + $0x188] sm:$0xff] %v1176
                  %v1178 = vld [vmem:[%s1076 + $0x190] sm:$0xff]
                  %1179 = vst [vmem:[%s1077 + $0x190] sm:$0xff] %v1178
                  %v1180 = vld [vmem:[%s1076 + $0x198] sm:$0xff]
                  %1181 = vst [vmem:[%s1077 + $0x198] sm:$0xff] %v1180
                  %v1182 = vld [vmem:[%s1076 + $0x1a0] sm:$0xff]
                  %1183 = vst [vmem:[%s1077 + $0x1a0] sm:$0xff] %v1182
                  %v1184 = vld [vmem:[%s1076 + $0x1a8] sm:$0xff]
                  %1185 = vst [vmem:[%s1077 + $0x1a8] sm:$0xff] %v1184
                  %v1186 = vld [vmem:[%s1076 + $0x1b0] sm:$0xff]
                  %1187 = vst [vmem:[%s1077 + $0x1b0] sm:$0xff] %v1186
                  %v1188 = vld [vmem:[%s1076 + $0x1b8] sm:$0xff]
                  %1189 = vst [vmem:[%s1077 + $0x1b8] sm:$0xff] %v1188
                  %v1190 = vld [vmem:[%s1076 + $0x1c0] sm:$0xff]
                  %1191 = vst [vmem:[%s1077 + $0x1c0] sm:$0xff] %v1190
                  %v1192 = vld [vmem:[%s1076 + $0x1c8] sm:$0xff]
                  %1193 = vst [vmem:[%s1077 + $0x1c8] sm:$0xff] %v1192
                  %v1194 = vld [vmem:[%s1076 + $0x1d0] sm:$0xff]
                  %1195 = vst [vmem:[%s1077 + $0x1d0] sm:$0xff] %v1194
                  %v1196 = vld [vmem:[%s1076 + $0x1d8] sm:$0xff]
                  %1197 = vst [vmem:[%s1077 + $0x1d8] sm:$0xff] %v1196
                  %v1198 = vld [vmem:[%s1076 + $0x1e0] sm:$0xff]
                  %1199 = vst [vmem:[%s1077 + $0x1e0] sm:$0xff] %v1198
                  %v1200 = vld [vmem:[%s1076 + $0x1e8] sm:$0xff]
                  %1201 = vst [vmem:[%s1077 + $0x1e8] sm:$0xff] %v1200
                  %v1202 = vld [vmem:[%s1076 + $0x1f0] sm:$0xff]
                  %1203 = vst [vmem:[%s1077 + $0x1f0] sm:$0xff] %v1202
                  %v1204 = vld [vmem:[%s1076 + $0x1f8] sm:$0xff]
                  %1205 = vst [vmem:[%s1077 + $0x1f8] sm:$0xff] %v1204
                  %s1206 = sadd.s32 1, %s1075
                  %p1207 = scmp.ge.s32.totalorder %s1206, %s1068
                  %s1208 = scalar_select %p1207, 0, %s1206
                  %s1209 = smul.u32 %s1208, 512
                  %s1210 = smul.u32 %s1208, 512
                  %s1211 = scalar_lea.vmem %s876, %s1209 [#allocation2]
                  %s1212 = scalar_lea.vmem %s887, %s1210
                $region67: #{tpu_custom_call.1} parent=61 // loop_footer
                  %s1072 = sadd.s32 %s1070, 1
                $region68: #{tpu_custom_call.1} parent=61 // loop_footer_branch
                  %1069 = sbr.rel target = $region64
                $region69: #{tpu_custom_call.1} parent=61 // loop_exit
                  _
                %s1213 = sshrl.u32 %s883, 6
                %s1214 = sand.u32 %s883, 63
                %s1215 = smul.u32 %s1213, 64
                %s1216 = smul.u32 8, %s1215
                %s1217 = scalar_lea.vmem %s876, %s1216 [#allocation2]
                %s1218 = smul.u32 8, %s1215
                %s1219 = scalar_lea.vmem %s887, %s1218
                // While loop
                $region70: #{tpu_custom_call.1} parent=61 // loop_pre_header
                  _
                $region71: #{tpu_custom_call.1} parent=61 // loop_header
                  %s1221 = sphi 0, %s1223
                  %p1222 = scmp.ge.s32.totalorder %s1221, %s1214
                  %s1226 = sphi 0, %s1233
                  %s1227 = sphi %s1217, %s1236
                  %s1228 = sphi %s1219, %s1237
                $region72: #{tpu_custom_call.1} parent=61 // loop_header_branch
                  %1225 = sbr.rel (%p1222) target = $region76
                $region73: #{tpu_custom_call.1} parent=61 // loop_body
                  %v1229 = vld [vmem:[%s1227] sm:$0xff]
                  %1230 = vst [vmem:[%s1228] sm:$0xff] %v1229
                  %s1231 = sadd.s32 1, %s1226
                  %p1232 = scmp.ge.s32.totalorder %s1231, %s1214
                  %s1233 = scalar_select %p1232, 0, %s1231
                  %s1234 = smul.u32 %s1233, 8
                  %s1235 = smul.u32 %s1233, 8
                  %s1236 = scalar_lea.vmem %s1217, %s1234 [#allocation2]
                  %s1237 = scalar_lea.vmem %s1219, %s1235
                $region74: #{tpu_custom_call.1} parent=61 // loop_footer
                  %s1223 = sadd.s32 %s1221, 1
                $region75: #{tpu_custom_call.1} parent=61 // loop_footer_branch
                  %1220 = sbr.rel target = $region71
                $region76: #{tpu_custom_call.1} parent=61 // loop_exit
                  _
              $region62: #{tpu_custom_call.1} parent=39 // pred_fallthru
                _
              // Predicated region
              $region77: #{tpu_custom_call.1} parent=39 // pred_check
                _
              $region78: #{tpu_custom_call.1} parent=39 // pred_check_branch
                %1239 = sbr.rel target = $region80
              $region79: #{tpu_custom_call.1} parent=39 // pred_region
                _
              $region80: #{tpu_custom_call.1} parent=39 // pred_fallthru
                _
            $region40: #{tpu_custom_call.1} parent=35 // pred_fallthru
              _
            // Predicated region
            $region41: #{tpu_custom_call.1} parent=35 // pred_check
              _
            $region42: #{tpu_custom_call.1} parent=35 // pred_check_branch
              %894 = sbr.rel target = $region44
            $region43: #{tpu_custom_call.1} parent=35 // pred_region
              %s896 = sshrl.u32 %s883, 6
              // While loop
              $region45: #{tpu_custom_call.1} parent=43 // loop_pre_header
                _
              $region46: #{tpu_custom_call.1} parent=43 // loop_header
                %s898 = sphi 0, %s900
                %p899 = scmp.ge.s32.totalorder %s898, %s896
                %s903 = sphi 0, %s1036
                %s904 = sphi %s876, %s1039
                %s905 = sphi %s887, %s1040
              $region47: #{tpu_custom_call.1} parent=43 // loop_header_branch
                %902 = sbr.rel (%p899) target = $region51
              $region48: #{tpu_custom_call.1} parent=43 // loop_body
                %v906 = vld [vmem:[%s904] sm:$0xff]
                %907 = vst [vmem:[%s905] sm:$0xff] %v906
                %v908 = vld [vmem:[%s904 + $0x8] sm:$0xff]
                %909 = vst [vmem:[%s905 + $0x8] sm:$0xff] %v908
                %v910 = vld [vmem:[%s904 + $0x10] sm:$0xff]
                %911 = vst [vmem:[%s905 + $0x10] sm:$0xff] %v910
                %v912 = vld [vmem:[%s904 + $0x18] sm:$0xff]
                %913 = vst [vmem:[%s905 + $0x18] sm:$0xff] %v912
                %v914 = vld [vmem:[%s904 + $0x20] sm:$0xff]
                %915 = vst [vmem:[%s905 + $0x20] sm:$0xff] %v914
                %v916 = vld [vmem:[%s904 + $0x28] sm:$0xff]
                %917 = vst [vmem:[%s905 + $0x28] sm:$0xff] %v916
                %v918 = vld [vmem:[%s904 + $0x30] sm:$0xff]
                %919 = vst [vmem:[%s905 + $0x30] sm:$0xff] %v918
                %v920 = vld [vmem:[%s904 + $0x38] sm:$0xff]
                %921 = vst [vmem:[%s905 + $0x38] sm:$0xff] %v920
                %v922 = vld [vmem:[%s904 + $0x40] sm:$0xff]
                %923 = vst [vmem:[%s905 + $0x40] sm:$0xff] %v922
                %v924 = vld [vmem:[%s904 + $0x48] sm:$0xff]
                %925 = vst [vmem:[%s905 + $0x48] sm:$0xff] %v924
                %v926 = vld [vmem:[%s904 + $0x50] sm:$0xff]
                %927 = vst [vmem:[%s905 + $0x50] sm:$0xff] %v926
                %v928 = vld [vmem:[%s904 + $0x58] sm:$0xff]
                %929 = vst [vmem:[%s905 + $0x58] sm:$0xff] %v928
                %v930 = vld [vmem:[%s904 + $0x60] sm:$0xff]
                %931 = vst [vmem:[%s905 + $0x60] sm:$0xff] %v930
                %v932 = vld [vmem:[%s904 + $0x68] sm:$0xff]
                %933 = vst [vmem:[%s905 + $0x68] sm:$0xff] %v932
                %v934 = vld [vmem:[%s904 + $0x70] sm:$0xff]
                %935 = vst [vmem:[%s905 + $0x70] sm:$0xff] %v934
                %v936 = vld [vmem:[%s904 + $0x78] sm:$0xff]
                %937 = vst [vmem:[%s905 + $0x78] sm:$0xff] %v936
                %v938 = vld [vmem:[%s904 + $0x80] sm:$0xff]
                %939 = vst [vmem:[%s905 + $0x80] sm:$0xff] %v938
                %v940 = vld [vmem:[%s904 + $0x88] sm:$0xff]
                %941 = vst [vmem:[%s905 + $0x88] sm:$0xff] %v940
                %v942 = vld [vmem:[%s904 + $0x90] sm:$0xff]
                %943 = vst [vmem:[%s905 + $0x90] sm:$0xff] %v942
                %v944 = vld [vmem:[%s904 + $0x98] sm:$0xff]
                %945 = vst [vmem:[%s905 + $0x98] sm:$0xff] %v944
                %v946 = vld [vmem:[%s904 + $0xa0] sm:$0xff]
                %947 = vst [vmem:[%s905 + $0xa0] sm:$0xff] %v946
                %v948 = vld [vmem:[%s904 + $0xa8] sm:$0xff]
                %949 = vst [vmem:[%s905 + $0xa8] sm:$0xff] %v948
                %v950 = vld [vmem:[%s904 + $0xb0] sm:$0xff]
                %951 = vst [vmem:[%s905 + $0xb0] sm:$0xff] %v950
                %v952 = vld [vmem:[%s904 + $0xb8] sm:$0xff]
                %953 = vst [vmem:[%s905 + $0xb8] sm:$0xff] %v952
                %v954 = vld [vmem:[%s904 + $0xc0] sm:$0xff]
                %955 = vst [vmem:[%s905 + $0xc0] sm:$0xff] %v954
                %v956 = vld [vmem:[%s904 + $0xc8] sm:$0xff]
                %957 = vst [vmem:[%s905 + $0xc8] sm:$0xff] %v956
                %v958 = vld [vmem:[%s904 + $0xd0] sm:$0xff]
                %959 = vst [vmem:[%s905 + $0xd0] sm:$0xff] %v958
                %v960 = vld [vmem:[%s904 + $0xd8] sm:$0xff]
                %961 = vst [vmem:[%s905 + $0xd8] sm:$0xff] %v960
                %v962 = vld [vmem:[%s904 + $0xe0] sm:$0xff]
                %963 = vst [vmem:[%s905 + $0xe0] sm:$0xff] %v962
                %v964 = vld [vmem:[%s904 + $0xe8] sm:$0xff]
                %965 = vst [vmem:[%s905 + $0xe8] sm:$0xff] %v964
                %v966 = vld [vmem:[%s904 + $0xf0] sm:$0xff]
                %967 = vst [vmem:[%s905 + $0xf0] sm:$0xff] %v966
                %v968 = vld [vmem:[%s904 + $0xf8] sm:$0xff]
                %969 = vst [vmem:[%s905 + $0xf8] sm:$0xff] %v968
                %v970 = vld [vmem:[%s904 + $0x100] sm:$0xff]
                %971 = vst [vmem:[%s905 + $0x100] sm:$0xff] %v970
                %v972 = vld [vmem:[%s904 + $0x108] sm:$0xff]
                %973 = vst [vmem:[%s905 + $0x108] sm:$0xff] %v972
                %v974 = vld [vmem:[%s904 + $0x110] sm:$0xff]
                %975 = vst [vmem:[%s905 + $0x110] sm:$0xff] %v974
                %v976 = vld [vmem:[%s904 + $0x118] sm:$0xff]
                %977 = vst [vmem:[%s905 + $0x118] sm:$0xff] %v976
                %v978 = vld [vmem:[%s904 + $0x120] sm:$0xff]
                %979 = vst [vmem:[%s905 + $0x120] sm:$0xff] %v978
                %v980 = vld [vmem:[%s904 + $0x128] sm:$0xff]
                %981 = vst [vmem:[%s905 + $0x128] sm:$0xff] %v980
                %v982 = vld [vmem:[%s904 + $0x130] sm:$0xff]
                %983 = vst [vmem:[%s905 + $0x130] sm:$0xff] %v982
                %v984 = vld [vmem:[%s904 + $0x138] sm:$0xff]
                %985 = vst [vmem:[%s905 + $0x138] sm:$0xff] %v984
                %v986 = vld [vmem:[%s904 + $0x140] sm:$0xff]
                %987 = vst [vmem:[%s905 + $0x140] sm:$0xff] %v986
                %v988 = vld [vmem:[%s904 + $0x148] sm:$0xff]
                %989 = vst [vmem:[%s905 + $0x148] sm:$0xff] %v988
                %v990 = vld [vmem:[%s904 + $0x150] sm:$0xff]
                %991 = vst [vmem:[%s905 + $0x150] sm:$0xff] %v990
                %v992 = vld [vmem:[%s904 + $0x158] sm:$0xff]
                %993 = vst [vmem:[%s905 + $0x158] sm:$0xff] %v992
                %v994 = vld [vmem:[%s904 + $0x160] sm:$0xff]
                %995 = vst [vmem:[%s905 + $0x160] sm:$0xff] %v994
                %v996 = vld [vmem:[%s904 + $0x168] sm:$0xff]
                %997 = vst [vmem:[%s905 + $0x168] sm:$0xff] %v996
                %v998 = vld [vmem:[%s904 + $0x170] sm:$0xff]
                %999 = vst [vmem:[%s905 + $0x170] sm:$0xff] %v998
                %v1000 = vld [vmem:[%s904 + $0x178] sm:$0xff]
                %1001 = vst [vmem:[%s905 + $0x178] sm:$0xff] %v1000
                %v1002 = vld [vmem:[%s904 + $0x180] sm:$0xff]
                %1003 = vst [vmem:[%s905 + $0x180] sm:$0xff] %v1002
                %v1004 = vld [vmem:[%s904 + $0x188] sm:$0xff]
                %1005 = vst [vmem:[%s905 + $0x188] sm:$0xff] %v1004
                %v1006 = vld [vmem:[%s904 + $0x190] sm:$0xff]
                %1007 = vst [vmem:[%s905 + $0x190] sm:$0xff] %v1006
                %v1008 = vld [vmem:[%s904 + $0x198] sm:$0xff]
                %1009 = vst [vmem:[%s905 + $0x198] sm:$0xff] %v1008
                %v1010 = vld [vmem:[%s904 + $0x1a0] sm:$0xff]
                %1011 = vst [vmem:[%s905 + $0x1a0] sm:$0xff] %v1010
                %v1012 = vld [vmem:[%s904 + $0x1a8] sm:$0xff]
                %1013 = vst [vmem:[%s905 + $0x1a8] sm:$0xff] %v1012
                %v1014 = vld [vmem:[%s904 + $0x1b0] sm:$0xff]
                %1015 = vst [vmem:[%s905 + $0x1b0] sm:$0xff] %v1014
                %v1016 = vld [vmem:[%s904 + $0x1b8] sm:$0xff]
                %1017 = vst [vmem:[%s905 + $0x1b8] sm:$0xff] %v1016
                %v1018 = vld [vmem:[%s904 + $0x1c0] sm:$0xff]
                %1019 = vst [vmem:[%s905 + $0x1c0] sm:$0xff] %v1018
                %v1020 = vld [vmem:[%s904 + $0x1c8] sm:$0xff]
                %1021 = vst [vmem:[%s905 + $0x1c8] sm:$0xff] %v1020
                %v1022 = vld [vmem:[%s904 + $0x1d0] sm:$0xff]
                %1023 = vst [vmem:[%s905 + $0x1d0] sm:$0xff] %v1022
                %v1024 = vld [vmem:[%s904 + $0x1d8] sm:$0xff]
                %1025 = vst [vmem:[%s905 + $0x1d8] sm:$0xff] %v1024
                %v1026 = vld [vmem:[%s904 + $0x1e0] sm:$0xff]
                %1027 = vst [vmem:[%s905 + $0x1e0] sm:$0xff] %v1026
                %v1028 = vld [vmem:[%s904 + $0x1e8] sm:$0xff]
                %1029 = vst [vmem:[%s905 + $0x1e8] sm:$0xff] %v1028
                %v1030 = vld [vmem:[%s904 + $0x1f0] sm:$0xff]
                %1031 = vst [vmem:[%s905 + $0x1f0] sm:$0xff] %v1030
                %v1032 = vld [vmem:[%s904 + $0x1f8] sm:$0xff]
                %1033 = vst [vmem:[%s905 + $0x1f8] sm:$0xff] %v1032
                %s1034 = sadd.s32 1, %s903
                %p1035 = scmp.ge.s32.totalorder %s1034, %s896
                %s1036 = scalar_select %p1035, 0, %s1034
                %s1037 = smul.u32 %s1036, 512
                %s1038 = smul.u32 %s1036, 512
                %s1039 = scalar_lea.vmem %s876, %s1037 [#allocation2]
                %s1040 = scalar_lea.vmem %s887, %s1038
              $region49: #{tpu_custom_call.1} parent=43 // loop_footer
                %s900 = sadd.s32 %s898, 1
              $region50: #{tpu_custom_call.1} parent=43 // loop_footer_branch
                %897 = sbr.rel target = $region46
              $region51: #{tpu_custom_call.1} parent=43 // loop_exit
                _
              %s1041 = sshrl.u32 %s883, 6
              %s1042 = sand.u32 %s883, 63
              %s1043 = smul.u32 %s1041, 64
              %s1044 = smul.u32 8, %s1043
              %s1045 = scalar_lea.vmem %s876, %s1044 [#allocation2]
              %s1046 = smul.u32 8, %s1043
              %s1047 = scalar_lea.vmem %s887, %s1046
              // While loop
              $region52: #{tpu_custom_call.1} parent=43 // loop_pre_header
                _
              $region53: #{tpu_custom_call.1} parent=43 // loop_header
                %s1049 = sphi 0, %s1051
                %p1050 = scmp.ge.s32.totalorder %s1049, %s1042
                %s1054 = sphi 0, %s1061
                %s1055 = sphi %s1045, %s1064
                %s1056 = sphi %s1047, %s1065
              $region54: #{tpu_custom_call.1} parent=43 // loop_header_branch
                %1053 = sbr.rel (%p1050) target = $region58
              $region55: #{tpu_custom_call.1} parent=43 // loop_body
                %v1057 = vld [vmem:[%s1055] sm:$0xff]
                %1058 = vst [vmem:[%s1056] sm:$0xff] %v1057
                %s1059 = sadd.s32 1, %s1054
                %p1060 = scmp.ge.s32.totalorder %s1059, %s1042
                %s1061 = scalar_select %p1060, 0, %s1059
                %s1062 = smul.u32 %s1061, 8
                %s1063 = smul.u32 %s1061, 8
                %s1064 = scalar_lea.vmem %s1045, %s1062 [#allocation2]
                %s1065 = scalar_lea.vmem %s1047, %s1063
              $region56: #{tpu_custom_call.1} parent=43 // loop_footer
                %s1051 = sadd.s32 %s1049, 1
              $region57: #{tpu_custom_call.1} parent=43 // loop_footer_branch
                %1048 = sbr.rel target = $region53
              $region58: #{tpu_custom_call.1} parent=43 // loop_exit
                _
            $region44: #{tpu_custom_call.1} parent=35 // pred_fallthru
              _
          $region36: #{tpu_custom_call.1} parent=31 // pred_fallthru
            _
          %1240 = vnop
        $region32: #{tpu_custom_call.1} parent=27 // pred_fallthru
          _
      $region28: #{tpu_custom_call.1} parent=5 // pred_fallthru
        _
      %p1241 = scmp.le.s32.totalorder 2, %s8
      // Predicated region
      $region81: #{tpu_custom_call.1} parent=5 // pred_check
        %p1242 = pneg %p1241
      $region82: #{tpu_custom_call.1} parent=5 // pred_check_branch
        %1244 = sbr.rel (%p1242) target = $region84
      $region83: #{tpu_custom_call.1} parent=5 // pred_region
        %s1245 = ssub.s32 %s8, 2
        // Predicated region
        $region85: #{tpu_custom_call.1} parent=83 // pred_check
          %p1246 = pneg %p84
        $region86: #{tpu_custom_call.1} parent=83 // pred_check_branch
          %1248 = sbr.rel (%p1246) target = $region88
        $region87: #{tpu_custom_call.1} parent=83 // pred_region
          %s1249 = sand.u32 %s69, 1
          %s1250 = sand.u32 %s69, 1
          %s1251 = smul.addr %s1250, 512
          %s1252 = scalar_lea.vmem [#allocation2], %s1251
        $region88: #{tpu_custom_call.1} parent=83 // pred_fallthru
          _
      $region84: #{tpu_custom_call.1} parent=5 // pred_fallthru
        _
    $region6: #{tpu_custom_call.1} parent=1 // loop_footer
      %s12 = sadd.s32 1, %s8
    $region7: #{tpu_custom_call.1} parent=1 // loop_footer_branch
      %7 = sbr.rel target = $region3
    $region8: #{tpu_custom_call.1} parent=1 // loop_exit
      _

</llo_original>
